<compile_context>
chip_gen: v6e
topology: v6e:2x2x1
jax: 0.10.0
libtpu: 0.0.40
codegen_flags: <defaults>
</compile_context>

<pallas_src>
import functools
import math

import jax
import jax.numpy as jnp
from jax import lax
from jax.experimental import pallas as pl
from jax.experimental.pallas import tpu as pltpu

BN_EPS = 1e-5
LANE = 128


def _round_up(x, m):
    return ((x + m - 1) // m) * m


def _cdiv(a, b):
    return -(-a // b)


# ----------------------------- fused Pallas kernel -----------------------------

def _fused_mlp_kernel(x_ref, w_in_ref, b_in_ref, w_ref, b_ref, o_ref, *, nblocks):
    """Full FOGModel forward for one row tile.

    x_ref   : (tm, in_f)  f32  input rows (lane dim = real feature count, un-padded)
    w_in_ref: (in_f, D)   bf16 in_layer weight (cols zero-padded to D)
    b_in_ref: (1, D)      f32  in_layer bias
    w_ref   : (L, D, D)   bf16 block weights (BN folded) + head weight, L = nblocks + 1
    b_ref   : (L, 1, D)   f32  block biases (BN folded) + head bias
    o_ref   : (tm, OUT_P) f32  lane-padded output slab (real outputs in first out_dim lanes)
    """
    out_p = o_ref.shape[1]

    # in_layer: plain Linear (bf16 matmul, f32 accumulation).
    h = jnp.dot(x_ref[...].astype(jnp.bfloat16), w_in_ref[...],
                preferred_element_type=jnp.float32) + b_in_ref[...]

    # blocks: Linear (eval-mode BN folded on host) -> ReLU.  Dropout == identity in eval.
    def block(i, h):
        y = jnp.dot(h.astype(jnp.bfloat16), w_ref[i],
                    preferred_element_type=jnp.float32) + b_ref[i]
        return jnp.maximum(y, 0.0)

    if nblocks <= 4:                      # small: keep the unroll (straight-line code)
        for i in range(nblocks):
            h = block(i, h)
    else:                                 # large: bound code size / live ranges
        h = lax.fori_loop(0, nblocks, block, h)

    # output head (last slot of the stack); write only the lane-padded output width.
    h = jnp.dot(h.astype(jnp.bfloat16), w_ref[nblocks],
                preferred_element_type=jnp.float32) + b_ref[nblocks]
    o_ref[...] = h[:, :out_p].astype(o_ref.dtype)
    # TODO(synk): training-mode Dropout / batch-statistics BatchNorm not implemented
    # (this reproduces the deterministic eval path of the PyTorch module).


# ----------------------------- host-side param packing (runs once) -----------------------------

def _pack_params(params, cfg, state):
    """Fold eval-mode BN into the block Linears, zero-pad to lane-dense shapes, cast
    weights to bf16, and stack the blocks + head into (L, D, D) / (L, 1, D)."""
    dim = cfg['model_hidden']
    in_f = cfg['window_size'] * 3
    nblocks = cfg['model_nblocks']
    head_w, head_b = params['out_pretrain'] if state == 'pretrain' else params['out_finetune']
    out_dim = head_w.shape[1]

    D = max(_round_up(dim, LANE), _round_up(out_dim, LANE), LANE)
    out_p = _round_up(out_dim, LANE)

    # in_layer kept separate so x never needs lane padding on the host.
    w0, b0 = params['in_layer']
    w_in = jnp.zeros((in_f, D), jnp.float32).at[:, :dim].set(w0).astype(jnp.bfloat16)
    b_in = jnp.zeros((1, D), jnp.float32).at[:, :dim].set(b0)

    ws, bs = [], []
    for (w, b), (gamma, beta, mean, var) in params['blocks']:
        scale = gamma * lax.rsqrt(var + BN_EPS)          # (1, dim)
        w_f = w * scale                                  # fold BN scale into W columns
        b_f = (b - mean) * scale + beta
        ws.append(jnp.zeros((D, D), jnp.float32).at[:dim, :dim].set(w_f))
        bs.append(jnp.zeros((1, D), jnp.float32).at[:, :dim].set(b_f))

    # head shares the stacked (D, D) slot; only the first out_dim columns are used.
    ws.append(jnp.zeros((D, D), jnp.float32).at[:dim, :out_dim].set(head_w))
    bs.append(jnp.zeros((1, D), jnp.float32).at[:, :out_dim].set(head_b))

    w_stk = jnp.stack(ws, axis=0).astype(jnp.bfloat16)   # (L, D, D) bf16
    b_stk = jnp.stack(bs, axis=0)                        # (L, 1, D) f32

    meta = dict(in_f=in_f, out_dim=out_dim, nblocks=nblocks, D=D, out_p=out_p)
    return w_in, b_in, w_stk, b_stk, meta


# ----------------------------- row tiling -----------------------------

def _row_tiling(n, row_tile, min_tiles):
    row_tile = max(8, (row_tile // 8) * 8)               # clamp to sublane multiple
    ntiles = _cdiv(n, row_tile)
    if n >= 8 * min_tiles:                                # >=2 tiles so v7x's 2 TCs both work
        ntiles = max(ntiles, min_tiles)
    tm = _round_up(_cdiv(n, ntiles), 8)                   # minimal tail padding
    grid = _cdiv(n, tm)
    return tm, grid, grid * tm


# ----------------------------- forward (jitted wrapper around the kernel) -----------------------------

def _fog_forward_impl(x, w_in, b_in, w_stk, b_stk, *, in_f, out_dim, nblocks,
                      D, out_p, row_tile, min_row_tiles):
    n = x.shape[0]
    x2 = x.reshape(n, in_f).astype(jnp.float32)

    tm, grid, n_pad = _row_tiling(n, row_tile, min_row_tiles)
    if n_pad != n:
        x2 = jnp.pad(x2, ((0, n_pad - n), (0, 0)))        # row padding only (no lane pad)

    L = nblocks + 1

    # VMEM scaling guard: x/out double-buffered, weights fetched once (constant index_map).
    vmem_est = (2 * tm * in_f * 4 + 2 * tm * out_p * 4
                + 2 * (in_f * D * 2 + D * 4 + L * D * D * 2 + L * D * 4))
    vmem_limit = int(min(max(2 * vmem_est, 32 << 20), 64 << 20))

    out = pl.pallas_call(
        functools.partial(_fused_mlp_kernel, nblocks=nblocks),
        out_shape=jax.ShapeDtypeStruct((n_pad, out_p), jnp.float32),
        grid=(grid,),
        in_specs=[
            pl.BlockSpec((tm, in_f), lambda i: (i, 0)),       # x: tiled over rows
            pl.BlockSpec((in_f, D), lambda i: (0, 0)),        # in_layer W (grid-invariant)
            pl.BlockSpec((1, D), lambda i: (0, 0)),           # in_layer b (grid-invariant)
            pl.BlockSpec((L, D, D), lambda i: (0, 0, 0)),     # blocks+head W (grid-invariant)
            pl.BlockSpec((L, 1, D), lambda i: (0, 0, 0)),     # blocks+head b (grid-invariant)
        ],
        out_specs=pl.BlockSpec((tm, out_p), lambda i: (i, 0)),
        compiler_params=pltpu.CompilerParams(
            dimension_semantics=("parallel",),
            vmem_limit_bytes=vmem_limit),
        cost_estimate=pl.CostEstimate(
            flops=2 * n_pad * (in_f * D + nblocks * D * D + D * out_p),
            transcendentals=0,
            bytes_accessed=(4 * n_pad * in_f + 4 * n_pad * out_p
                            + 2 * (in_f * D + L * D * D) + 4 * D * (L + 1))),
    )(x2, w_in, b_in, w_stk, b_stk)

    return out[:n, :out_dim]


def make_fog_forward(params, cfg, state='finetune', *, row_tile=1024, min_row_tiles=2):
    """Pack/fold parameters once and return a jitted `forward(x) -> (n, out_dim)`."""
    w_in, b_in, w_stk, b_stk, meta = _pack_params(params, cfg, state)
    impl = functools.partial(_fog_forward_impl, row_tile=row_tile,
                             min_row_tiles=min_row_tiles, **meta)

    @jax.jit
    def forward(x):
        return impl(x, w_in, b_in, w_stk, b_stk)

    return forward


def fog_model_forward(params, x, cfg, state='finetune'):
    """One-shot convenience wrapper (prefer make_fog_forward to amortize packing)."""
    return make_fog_forward(params, cfg, state)(x)


# ----------------------------- parameter init (deterministic) -----------------------------

def _init_linear(key, in_f, out_f):
    # PyTorch nn.Linear default init: U(-1/sqrt(fan_in), 1/sqrt(fan_in)).
    kw, kb = jax.random.split(key)
    bound = 1.0 / math.sqrt(in_f)
    w = jax.random.uniform(kw, (in_f, out_f), jnp.float32, -bound, bound)  # stored (in, out)
    b = jax.random.uniform(kb, (1, out_f), jnp.float32, -bound, bound)
    return w, b


def _init_bn(key, dim):
    # Deterministic but non-trivial BN params / running stats.
    k1, k2, k3, k4 = jax.random.split(key, 4)
    gamma = 1.0 + 0.1 * jax.random.normal(k1, (1, dim), jnp.float32)
    beta = 0.1 * jax.random.normal(k2, (1, dim), jnp.float32)
    mean = 0.1 * jax.random.normal(k3, (1, dim), jnp.float32)
    var = 1.0 + 0.1 * jax.random.uniform(k4, (1, dim), jnp.float32)
    return gamma, beta, mean, var


def init_fog_params(key, cfg):
    dim = cfg['model_hidden']
    nblocks = cfg['model_nblocks']
    keys = jax.random.split(key, 3 + 2 * nblocks)
    params = {}
    params['in_layer'] = _init_linear(keys[0], cfg['window_size'] * 3, dim)
    params['blocks'] = []
    for i in range(nblocks):
        lin = _init_linear(keys[1 + 2 * i], dim, dim)
        bn = _init_bn(keys[2 + 2 * i], dim)
        params['blocks'].append((lin, bn))
    params['out_pretrain'] = _init_linear(keys[1 + 2 * nblocks], dim, cfg['window_future'] * 3)
    params['out_finetune'] = _init_linear(keys[2 + 2 * nblocks], dim, 3)
    return params


# ----------------------------- reference (pure JAX, f32, un-folded BN) -----------------------------

def fog_model_forward_ref(params, x, cfg, state='finetune'):
    n = x.shape[0]
    x = x.reshape(n, cfg['window_size'] * 3)
    w, b = params['in_layer']
    x = x @ w + b
    for (lin, bn) in params['blocks']:
        (w, b), (gamma, beta, mean, var) = lin, bn
        y = x @ w + b
        y = (y - mean) / jnp.sqrt(var + BN_EPS) * gamma + beta
        x = jnp.maximum(y, 0.0)
    w, b = params['out_pretrain'] if state == 'pretrain' else params['out_finetune']
    return x @ w + b


# ----------------------------- main -----------------------------

if __name__ == "__main__":
    cfg = {
        'model_dropout': 0.1,
        'model_hidden': 32,
        'model_nblocks': 2,
        'window_size': 16,
        'window_future': 4,
    }

    key = jax.random.PRNGKey(0)
    kp, kx = jax.random.split(key)
    params = init_fog_params(kp, cfg)

    batch = 8
    x = jax.random.normal(kx, (batch, cfg['window_size'], 3), jnp.float32)

    forward = make_fog_forward(params, cfg, state='finetune')
    out = jax.block_until_ready(forward(x))

    ref = fog_model_forward_ref(params, x, cfg, state='finetune')
    assert out.shape == (batch, 3), out.shape
    max_err = float(jnp.max(jnp.abs(out - ref)))
    # bf16 weights/activations with f32 accumulation -> relaxed tolerance vs. f32 reference.
    assert jnp.allclose(out, ref, atol=5e-2, rtol=5e-2), max_err

    print("KERNEL_OK")
</pallas_src>

<mosaic_0001>
module attributes {stable_mosaic.version = 11 : i64} {
  func.func @_fused_mlp_kernel(%arg0: i32, %arg1: memref<8x48xf32, #tpu.memory_space<vmem>>, %arg2: memref<48x128xbf16, #tpu.memory_space<vmem>>, %arg3: memref<1x128xf32, #tpu.memory_space<vmem>>, %arg4: memref<3x128x128xbf16, #tpu.memory_space<vmem>>, %arg5: memref<3x1x128xf32, #tpu.memory_space<vmem>>, %arg6: memref<8x128xf32, #tpu.memory_space<vmem>>) attributes {dimension_semantics = [#tpu.dimension_semantics<parallel>], iteration_bounds = array<i64: 1>, scalar_prefetch = 0 : i64, scratch_operands = 0 : i64, tpu.core_type = #tpu.core_type<tc>, window_params = [{transform_indices = @transform_0, window_bounds = array<i64: 8, 48>}, {pipeline_mode = #tpu.pipeline_mode<synchronous>, transform_indices = @transform_1, window_bounds = array<i64: 48, 128>}, {pipeline_mode = #tpu.pipeline_mode<synchronous>, transform_indices = @transform_2, window_bounds = array<i64: 1, 128>}, {pipeline_mode = #tpu.pipeline_mode<synchronous>, transform_indices = @transform_3, window_bounds = array<i64: 3, 128, 128>}, {pipeline_mode = #tpu.pipeline_mode<synchronous>, transform_indices = @transform_4, window_bounds = array<i64: 3, 1, 128>}, {transform_indices = @transform_5, window_bounds = array<i64: 8, 128>}]} {
    %c0 = arith.constant 0 : index
    %c0_0 = arith.constant 0 : index
    %0 = vector.load %arg1[%c0, %c0_0] : memref<8x48xf32, #tpu.memory_space<vmem>>, vector<8x48xf32>
    %1 = arith.truncf %0 : vector<8x48xf32> to vector<8x48xbf16>
    %c0_1 = arith.constant 0 : index
    %c0_2 = arith.constant 0 : index
    %2 = vector.load %arg2[%c0_1, %c0_2] : memref<48x128xbf16, #tpu.memory_space<vmem>>, vector<48x128xbf16>
    %cst = arith.constant dense<0.000000e+00> : vector<8x128xf32>
    %3 = tpu.matmul %1, %2, %cst {dimension_numbers = #tpu.dot_dimension_numbers<[1], [0], [0], [1], [0, 0, 1, 1], [], []>} : vector<8x48xbf16>, vector<48x128xbf16>, vector<8x128xf32> -> vector<8x128xf32>
    %c0_3 = arith.constant 0 : index
    %c0_4 = arith.constant 0 : index
    %4 = vector.load %arg3[%c0_3, %c0_4] : memref<1x128xf32, #tpu.memory_space<vmem>>, vector<1x128xf32>
    %5 = vector.broadcast %4 : vector<1x128xf32> to vector<8x128xf32>
    %6 = arith.addf %3, %5 : vector<8x128xf32>
    %7 = arith.truncf %6 : vector<8x128xf32> to vector<8x128xbf16>
    %c0_5 = arith.constant 0 : index
    %c0_6 = arith.constant 0 : index
    %c0_7 = arith.constant 0 : index
    %8 = vector.load %arg4[%c0_5, %c0_6, %c0_7] : memref<3x128x128xbf16, #tpu.memory_space<vmem>>, vector<1x128x128xbf16>
    %9 = vector.shape_cast %8 : vector<1x128x128xbf16> to vector<128x128xbf16>
    %cst_8 = arith.constant dense<0.000000e+00> : vector<8x128xf32>
    %10 = tpu.matmul %7, %9, %cst_8 {dimension_numbers = #tpu.dot_dimension_numbers<[1], [0], [0], [1], [0, 0, 1, 1], [], []>} : vector<8x128xbf16>, vector<128x128xbf16>, vector<8x128xf32> -> vector<8x128xf32>
    %c0_9 = arith.constant 0 : index
    %c0_10 = arith.constant 0 : index
    %c0_11 = arith.constant 0 : index
    %11 = vector.load %arg5[%c0_9, %c0_10, %c0_11] : memref<3x1x128xf32, #tpu.memory_space<vmem>>, vector<1x1x128xf32>
    %12 = vector.shape_cast %11 : vector<1x1x128xf32> to vector<1x128xf32>
    %13 = vector.broadcast %12 : vector<1x128xf32> to vector<8x128xf32>
    %14 = arith.addf %10, %13 : vector<8x128xf32>
    %cst_12 = arith.constant 0.000000e+00 : f32
    %15 = vector.broadcast %cst_12 : f32 to vector<8x128xf32>
    %16 = arith.maximumf %14, %15 : vector<8x128xf32>
    %17 = arith.truncf %16 : vector<8x128xf32> to vector<8x128xbf16>
    %c1 = arith.constant 1 : index
    %c0_13 = arith.constant 0 : index
    %c0_14 = arith.constant 0 : index
    %18 = vector.load %arg4[%c1, %c0_13, %c0_14] : memref<3x128x128xbf16, #tpu.memory_space<vmem>>, vector<1x128x128xbf16>
    %19 = vector.shape_cast %18 : vector<1x128x128xbf16> to vector<128x128xbf16>
    %cst_15 = arith.constant dense<0.000000e+00> : vector<8x128xf32>
    %20 = tpu.matmul %17, %19, %cst_15 {dimension_numbers = #tpu.dot_dimension_numbers<[1], [0], [0], [1], [0, 0, 1, 1], [], []>} : vector<8x128xbf16>, vector<128x128xbf16>, vector<8x128xf32> -> vector<8x128xf32>
    %c1_16 = arith.constant 1 : index
    %c0_17 = arith.constant 0 : index
    %c0_18 = arith.constant 0 : index
    %21 = vector.load %arg5[%c1_16, %c0_17, %c0_18] : memref<3x1x128xf32, #tpu.memory_space<vmem>>, vector<1x1x128xf32>
    %22 = vector.shape_cast %21 : vector<1x1x128xf32> to vector<1x128xf32>
    %23 = vector.broadcast %22 : vector<1x128xf32> to vector<8x128xf32>
    %24 = arith.addf %20, %23 : vector<8x128xf32>
    %cst_19 = arith.constant 0.000000e+00 : f32
    %25 = vector.broadcast %cst_19 : f32 to vector<8x128xf32>
    %26 = arith.maximumf %24, %25 : vector<8x128xf32>
    %27 = arith.truncf %26 : vector<8x128xf32> to vector<8x128xbf16>
    %c2 = arith.constant 2 : index
    %c0_20 = arith.constant 0 : index
    %c0_21 = arith.constant 0 : index
    %28 = vector.load %arg4[%c2, %c0_20, %c0_21] : memref<3x128x128xbf16, #tpu.memory_space<vmem>>, vector<1x128x128xbf16>
    %29 = vector.shape_cast %28 : vector<1x128x128xbf16> to vector<128x128xbf16>
    %cst_22 = arith.constant dense<0.000000e+00> : vector<8x128xf32>
    %30 = tpu.matmul %27, %29, %cst_22 {dimension_numbers = #tpu.dot_dimension_numbers<[1], [0], [0], [1], [0, 0, 1, 1], [], []>} : vector<8x128xbf16>, vector<128x128xbf16>, vector<8x128xf32> -> vector<8x128xf32>
    %c2_23 = arith.constant 2 : index
    %c0_24 = arith.constant 0 : index
    %c0_25 = arith.constant 0 : index
    %31 = vector.load %arg5[%c2_23, %c0_24, %c0_25] : memref<3x1x128xf32, #tpu.memory_space<vmem>>, vector<1x1x128xf32>
    %32 = vector.shape_cast %31 : vector<1x1x128xf32> to vector<1x128xf32>
    %33 = vector.broadcast %32 : vector<1x128xf32> to vector<8x128xf32>
    %34 = arith.addf %30, %33 : vector<8x128xf32>
    %c0_26 = arith.constant 0 : index
    %c0_27 = arith.constant 0 : index
    %35 = vector.load %arg6[%c0_26, %c0_27] : memref<8x128xf32, #tpu.memory_space<vmem>>, vector<8x128xf32>
    tpu.vector_store %arg6[%c0_26, %c0_27], %34 {strides = array<i32>} : memref<8x128xf32, #tpu.memory_space<vmem>>, vector<8x128xf32>,
    return
  }
  func.func @transform_0(%arg0: i32) -> (i32, i32) {
    %c0_i32 = arith.constant 0 : i32
    %c0_i32_0 = arith.constant 0 : i32
    return %arg0, %c0_i32 : i32, i32
  }
  func.func @transform_1(%arg0: i32) -> (i32, i32) {
    %c0_i32 = arith.constant 0 : i32
    %c0_i32_0 = arith.constant 0 : i32
    %c0_i32_1 = arith.constant 0 : i32
    return %c0_i32, %c0_i32_0 : i32, i32
  }
  func.func @transform_2(%arg0: i32) -> (i32, i32) {
    %c0_i32 = arith.constant 0 : i32
    %c0_i32_0 = arith.constant 0 : i32
    %c0_i32_1 = arith.constant 0 : i32
    return %c0_i32, %c0_i32_0 : i32, i32
  }
  func.func @transform_3(%arg0: i32) -> (i32, i32, i32) {
    %c0_i32 = arith.constant 0 : i32
    %c0_i32_0 = arith.constant 0 : i32
    %c0_i32_1 = arith.constant 0 : i32
    %c0_i32_2 = arith.constant 0 : i32
    return %c0_i32, %c0_i32_0, %c0_i32_1 : i32, i32, i32
  }
  func.func @transform_4(%arg0: i32) -> (i32, i32, i32) {
    %c0_i32 = arith.constant 0 : i32
    %c0_i32_0 = arith.constant 0 : i32
    %c0_i32_1 = arith.constant 0 : i32
    %c0_i32_2 = arith.constant 0 : i32
    return %c0_i32, %c0_i32_0, %c0_i32_1 : i32, i32, i32
  }
  func.func @transform_5(%arg0: i32) -> (i32, i32) {
    %c0_i32 = arith.constant 0 : i32
    %c0_i32_0 = arith.constant 0 : i32
    return %arg0, %c0_i32 : i32, i32
  }
}

</mosaic_0001>

<llo_original>
// kernel: forward.1
$region0: #{forward.1}
  #allocation0 [shape = 'u32[]', space=smem, size = 0x4, offset = 0x4, fixed_abs, tag = 'smem constant byte address 0x4 - core index']
  #allocation1 [shape = 'u32[144,128]{1,0:T(1,128)}', space=vmem, size = 0x12000, scoped, tag = 'internal scratch']
  %s0 = inlined_call_operand.vmem [shape: f32[8,48], index: 0, kind: input, shape index: {}]
  %s1 = inlined_call_operand.vmem [shape: bf16[48,128], index: 1, kind: input, shape index: {}]
  %s2 = inlined_call_operand.vmem [shape: f32[1,128], index: 2, kind: input, shape index: {}]
  %s3 = inlined_call_operand.vmem [shape: bf16[3,128,128], index: 3, kind: input, shape index: {}]
  %s4 = inlined_call_operand.vmem [shape: f32[3,1,128], index: 4, kind: input, shape index: {}]
  %s5 = inlined_call_operand.vmem [shape: f32[8,128], index: 5, kind: output, shape index: {}]
  %s6 = sld [smem:[#allocation0]]
  $region30: #{forward.1} parent=0
    _
  %s8 = ssub.s32 1, %s6
  %s9 = scalar_select 0, %s8, %s6
  // Predicated region
  $region2: #{forward.1} parent=0 // pred_check
    _
  $region3: #{forward.1} parent=0 // pred_check_branch
    %11 = sbr.rel (0) target = $region5
  $region4: #{forward.1} parent=0 // pred_region
    _
  $region5: #{forward.1} parent=0 // pred_fallthru
    _
  // Predicated region
  $region6: #{forward.1} parent=0 // pred_check
    _
  $region7: #{forward.1} parent=0 // pred_check_branch
    %13 = sbr.rel (0) target = $region9
  $region8: #{forward.1} parent=0 // pred_region
    _
  $region9: #{forward.1} parent=0 // pred_fallthru
    _
  // Predicated region
  $region10: #{forward.1} parent=0 // pred_check
    _
  $region11: #{forward.1} parent=0 // pred_check_branch
    %15 = sbr.rel (0) target = $region13
  $region12: #{forward.1} parent=0 // pred_region
    _
  $region13: #{forward.1} parent=0 // pred_fallthru
    _
  // Predicated region
  $region14: #{forward.1} parent=0 // pred_check
    _
  $region15: #{forward.1} parent=0 // pred_check_branch
    %17 = sbr.rel (0) target = $region17
  $region16: #{forward.1} parent=0 // pred_region
    _
  $region17: #{forward.1} parent=0 // pred_fallthru
    _
  // Predicated region
  $region18: #{forward.1} parent=0 // pred_check
    _
  $region19: #{forward.1} parent=0 // pred_check_branch
    %19 = sbr.rel (0) target = $region21
  $region20: #{forward.1} parent=0 // pred_region
    _
  $region21: #{forward.1} parent=0 // pred_fallthru
    _
  %v21 = vld [vmem:[%s0] sm:$0xff]
  %v22 = vpack.c.bf16 %v21, %v21
  %v23 = vld [vmem:[%s1] sm:$0xf]
  %v24 = vld [vmem:[%s1 + $0x4] sm:$0xf]
  %v25 = vld [vmem:[%s1 + $0x8] sm:$0xf]
  %v26 = vld [vmem:[%s1 + $0xc] sm:$0xf]
  %v27 = vld [vmem:[%s1 + $0x10] sm:$0xf]
  %v28 = vld [vmem:[%s1 + $0x14] sm:$0xf]
  %v29 = vld [vmem:[%s2] sm:$0x1]
  %v31 = vlaneseq
  %v32 = vshrl.u32 %v31, 7
  %v33 = vsub.s32 0, %v32
  %v34 = vrot.slane %v29, %v33
  %v42 = vunpack.c.l.b16 %v23
  %v43 = vunpack.c.l.b16 %v24
  %v44 = vunpack.c.l.b16 %v25
  %v45 = vunpack.c.l.b16 %v26
  %v46 = vunpack.c.l.b16 %v27
  %v47 = vunpack.c.l.b16 %v28
  %v48 = vpack.c.b16 %v43, %v42
  %v49 = vpack.c.b16 %v45, %v44
  %v50 = vpack.c.b16 %v47, %v46
  %vm54 = vcmask 392192
  %v56 = vsel %vm54, %v22, 0
  %58 = vmatprep.subr.bf16.mxu0 0
  %59 = vmatpush1.bf16.msra.mxu0 0
  %60 = vmatprep.subr.bf16.mxu0 0
  %61 = vmatpush1.bf16.msra.mxu0 0
  %62 = vmatprep.subr.bf16.mxu0 0
  %63 = vmatpush1.bf16.msra.mxu0 0
  %64 = vmatprep.subr.bf16.mxu0 0
  %65 = vmatpush1.bf16.msra.mxu0 0
  %66 = vmatprep.subr.bf16.mxu0 0
  %67 = vmatpush1.bf16.msra.mxu0 0
  %68 = vmatprep.subr.bf16.mxu0 0
  %69 = vmatpush1.bf16.msra.mxu0 %v50
  %70 = vmatprep.subr.bf16.mxu0 0
  %71 = vmatpush1.bf16.msra.mxu0 %v49
  %72 = vmatprep.subr.bf16.mxu0 0
  %73 = vmatpush1.bf16.msra.mxu0 %v48
  %74 = vmatprep.subr.bf16.mxu0 0
  %75 = vmatpush2.bf16.msra.mxu0 0
  %76 = vmatprep.subr.bf16.mxu0 0
  %77 = vmatpush2.bf16.msra.mxu0 0
  %78 = vmatprep.subr.bf16.mxu0 0
  %79 = vmatpush2.bf16.msra.mxu0 0
  %80 = vmatprep.subr.bf16.mxu0 0
  %81 = vmatpush2.bf16.msra.mxu0 0
  %82 = vmatprep.subr.bf16.mxu0 0
  %83 = vmatpush2.bf16.msra.mxu0 0
  %84 = vmatprep.subr.bf16.mxu0 0
  %85 = vmatpush2.bf16.msra.mxu0 0
  %86 = vmatprep.subr.bf16.mxu0 0
  %87 = vmatpush2.bf16.msra.mxu0 0
  %88 = vmatprep.subr.bf16.mxu0 0
  %89 = vmatpush2.bf16.msra.mxu0 0
  %90 = vmatprep.mubr.bf16.mxu0 0
  %91 = vmatmul.mubr.bf16.gmra.mxu0 %v56
  %v92 = vpop.f32.mrf.mxu0
  %v93 = vadd.f32 %v34, %v92
  %v94 = vpop.f32.mrf.mxu0
  %v95 = vpop.f32.mrf.mxu0
  %v96 = vpop.f32.mrf.mxu0
  %97 = vdwg.mxu0
  %v98 = vpack.c.bf16 %v93, %v93
  %v99 = vld [vmem:[%s3] sm:$0xf]
  %v100 = vld [vmem:[%s3 + $0x4] sm:$0xf]
  %v101 = vld [vmem:[%s3 + $0x8] sm:$0xf]
  %v102 = vld [vmem:[%s3 + $0xc] sm:$0xf]
  %v103 = vld [vmem:[%s3 + $0x10] sm:$0xf]
  %v104 = vld [vmem:[%s3 + $0x14] sm:$0xf]
  %v105 = vld [vmem:[%s3 + $0x18] sm:$0xf]
  %v106 = vld [vmem:[%s3 + $0x1c] sm:$0xf]
  %v107 = vld [vmem:[%s3 + $0x20] sm:$0xf]
  %v108 = vld [vmem:[%s3 + $0x24] sm:$0xf]
  %v109 = vld [vmem:[%s3 + $0x28] sm:$0xf]
  %v110 = vld [vmem:[%s3 + $0x2c] sm:$0xf]
  %v111 = vld [vmem:[%s3 + $0x30] sm:$0xf]
  %v112 = vld [vmem:[%s3 + $0x34] sm:$0xf]
  %v113 = vld [vmem:[%s3 + $0x38] sm:$0xf]
  %v114 = vld [vmem:[%s3 + $0x3c] sm:$0xf]
  %v115 = vld [vmem:[%s4] sm:$0x1]
  %v117 = vlaneseq
  %v118 = vshrl.u32 %v117, 7
  %v119 = vsub.s32 0, %v118
  %v120 = vrot.slane %v115, %v119
  %v138 = vunpack.c.l.b16 %v99
  %v139 = vunpack.c.l.b16 %v100
  %v140 = vunpack.c.l.b16 %v101
  %v141 = vunpack.c.l.b16 %v102
  %v142 = vunpack.c.l.b16 %v103
  %v143 = vunpack.c.l.b16 %v104
  %v144 = vunpack.c.l.b16 %v105
  %v145 = vunpack.c.l.b16 %v106
  %v146 = vunpack.c.l.b16 %v107
  %v147 = vunpack.c.l.b16 %v108
  %v148 = vunpack.c.l.b16 %v109
  %v149 = vunpack.c.l.b16 %v110
  %v150 = vunpack.c.l.b16 %v111
  %v151 = vunpack.c.l.b16 %v112
  %v152 = vunpack.c.l.b16 %v113
  %v153 = vunpack.c.l.b16 %v114
  %v154 = vpack.c.b16 %v139, %v138
  %v155 = vpack.c.b16 %v141, %v140
  %v156 = vpack.c.b16 %v143, %v142
  %v157 = vpack.c.b16 %v145, %v144
  %v158 = vpack.c.b16 %v147, %v146
  %v159 = vpack.c.b16 %v149, %v148
  %v160 = vpack.c.b16 %v151, %v150
  %v161 = vpack.c.b16 %v153, %v152
  %170 = vmatprep.subr.bf16.mxu0 0
  %171 = vmatpush1.bf16.msra.mxu0 %v161
  %172 = vmatprep.subr.bf16.mxu0 0
  %173 = vmatpush1.bf16.msra.mxu0 %v160
  %174 = vmatprep.subr.bf16.mxu0 0
  %175 = vmatpush1.bf16.msra.mxu0 %v159
  %176 = vmatprep.subr.bf16.mxu0 0
  %177 = vmatpush1.bf16.msra.mxu0 %v158
  %178 = vmatprep.subr.bf16.mxu0 0
  %179 = vmatpush1.bf16.msra.mxu0 %v157
  %180 = vmatprep.subr.bf16.mxu0 0
  %181 = vmatpush1.bf16.msra.mxu0 %v156
  %182 = vmatprep.subr.bf16.mxu0 0
  %183 = vmatpush1.bf16.msra.mxu0 %v155
  %184 = vmatprep.subr.bf16.mxu0 0
  %185 = vmatpush1.bf16.msra.mxu0 %v154
  %186 = vmatprep.subr.bf16.mxu0 0
  %187 = vmatpush2.bf16.msra.mxu0 0
  %188 = vmatprep.subr.bf16.mxu0 0
  %189 = vmatpush2.bf16.msra.mxu0 0
  %190 = vmatprep.subr.bf16.mxu0 0
  %191 = vmatpush2.bf16.msra.mxu0 0
  %192 = vmatprep.subr.bf16.mxu0 0
  %193 = vmatpush2.bf16.msra.mxu0 0
  %194 = vmatprep.subr.bf16.mxu0 0
  %195 = vmatpush2.bf16.msra.mxu0 0
  %196 = vmatprep.subr.bf16.mxu0 0
  %197 = vmatpush2.bf16.msra.mxu0 0
  %198 = vmatprep.subr.bf16.mxu0 0
  %199 = vmatpush2.bf16.msra.mxu0 0
  %200 = vmatprep.subr.bf16.mxu0 0
  %201 = vmatpush2.bf16.msra.mxu0 0
  %202 = vmatprep.mubr.bf16.mxu0 0
  %203 = vmatmul.mubr.bf16.gmra.mxu0 %v98
  %v204 = vpop.f32.mrf.mxu0
  %v205 = vadd.f32 %v120, %v204
  %v206 = vpop.f32.mrf.mxu0
  %v207 = vpop.f32.mrf.mxu0
  %v208 = vpop.f32.mrf.mxu0
  %209 = vdwg.mxu0
  %v210 = vmax.f32 %v205, 0.0
  %v211 = vpack.c.bf16 %v210, %v210
  %s212 = scalar_lea.vmem %s3, 64
  %v213 = vld [vmem:[%s212] sm:$0xf]
  %v214 = vld [vmem:[%s212 + $0x4] sm:$0xf]
  %v215 = vld [vmem:[%s212 + $0x8] sm:$0xf]
  %v216 = vld [vmem:[%s212 + $0xc] sm:$0xf]
  %v217 = vld [vmem:[%s212 + $0x10] sm:$0xf]
  %v218 = vld [vmem:[%s212 + $0x14] sm:$0xf]
  %v219 = vld [vmem:[%s212 + $0x18] sm:$0xf]
  %v220 = vld [vmem:[%s212 + $0x1c] sm:$0xf]
  %v221 = vld [vmem:[%s212 + $0x20] sm:$0xf]
  %v222 = vld [vmem:[%s212 + $0x24] sm:$0xf]
  %v223 = vld [vmem:[%s212 + $0x28] sm:$0xf]
  %v224 = vld [vmem:[%s212 + $0x2c] sm:$0xf]
  %v225 = vld [vmem:[%s212 + $0x30] sm:$0xf]
  %v226 = vld [vmem:[%s212 + $0x34] sm:$0xf]
  %v227 = vld [vmem:[%s212 + $0x38] sm:$0xf]
  %v228 = vld [vmem:[%s212 + $0x3c] sm:$0xf]
  %s229 = scalar_lea.vmem %s4, 1
  %v230 = vld [vmem:[%s229] sm:$0x1]
  %v232 = vlaneseq
  %v233 = vshrl.u32 %v232, 7
  %v234 = vsub.s32 0, %v233
  %v235 = vrot.slane %v230, %v234
  %v253 = vunpack.c.l.b16 %v213
  %v254 = vunpack.c.l.b16 %v214
  %v255 = vunpack.c.l.b16 %v215
  %v256 = vunpack.c.l.b16 %v216
  %v257 = vunpack.c.l.b16 %v217
  %v258 = vunpack.c.l.b16 %v218
  %v259 = vunpack.c.l.b16 %v219
  %v260 = vunpack.c.l.b16 %v220
  %v261 = vunpack.c.l.b16 %v221
  %v262 = vunpack.c.l.b16 %v222
  %v263 = vunpack.c.l.b16 %v223
  %v264 = vunpack.c.l.b16 %v224
  %v265 = vunpack.c.l.b16 %v225
  %v266 = vunpack.c.l.b16 %v226
  %v267 = vunpack.c.l.b16 %v227
  %v268 = vunpack.c.l.b16 %v228
  %v269 = vpack.c.b16 %v254, %v253
  %v270 = vpack.c.b16 %v256, %v255
  %v271 = vpack.c.b16 %v258, %v257
  %v272 = vpack.c.b16 %v260, %v259
  %v273 = vpack.c.b16 %v262, %v261
  %v274 = vpack.c.b16 %v264, %v263
  %v275 = vpack.c.b16 %v266, %v265
  %v276 = vpack.c.b16 %v268, %v267
  %285 = vmatprep.subr.bf16.mxu0 0
  %286 = vmatpush1.bf16.msra.mxu0 %v276
  %287 = vmatprep.subr.bf16.mxu0 0
  %288 = vmatpush1.bf16.msra.mxu0 %v275
  %289 = vmatprep.subr.bf16.mxu0 0
  %290 = vmatpush1.bf16.msra.mxu0 %v274
  %291 = vmatprep.subr.bf16.mxu0 0
  %292 = vmatpush1.bf16.msra.mxu0 %v273
  %293 = vmatprep.subr.bf16.mxu0 0
  %294 = vmatpush1.bf16.msra.mxu0 %v272
  %295 = vmatprep.subr.bf16.mxu0 0
  %296 = vmatpush1.bf16.msra.mxu0 %v271
  %297 = vmatprep.subr.bf16.mxu0 0
  %298 = vmatpush1.bf16.msra.mxu0 %v270
  %299 = vmatprep.subr.bf16.mxu0 0
  %300 = vmatpush1.bf16.msra.mxu0 %v269
  %301 = vmatprep.subr.bf16.mxu0 0
  %302 = vmatpush2.bf16.msra.mxu0 0
  %303 = vmatprep.subr.bf16.mxu0 0
  %304 = vmatpush2.bf16.msra.mxu0 0
  %305 = vmatprep.subr.bf16.mxu0 0
  %306 = vmatpush2.bf16.msra.mxu0 0
  %307 = vmatprep.subr.bf16.mxu0 0
  %308 = vmatpush2.bf16.msra.mxu0 0
  %309 = vmatprep.subr.bf16.mxu0 0
  %310 = vmatpush2.bf16.msra.mxu0 0
  %311 = vmatprep.subr.bf16.mxu0 0
  %312 = vmatpush2.bf16.msra.mxu0 0
  %313 = vmatprep.subr.bf16.mxu0 0
  %314 = vmatpush2.bf16.msra.mxu0 0
  %315 = vmatprep.subr.bf16.mxu0 0
  %316 = vmatpush2.bf16.msra.mxu0 0
  %317 = vmatprep.mubr.bf16.mxu0 0
  %318 = vmatmul.mubr.bf16.gmra.mxu0 %v211
  %v319 = vpop.f32.mrf.mxu0
  %v320 = vadd.f32 %v235, %v319
  %v321 = vpop.f32.mrf.mxu0
  %v322 = vpop.f32.mrf.mxu0
  %v323 = vpop.f32.mrf.mxu0
  %324 = vdwg.mxu0
  %v325 = vmax.f32 %v320, 0.0
  %v326 = vpack.c.bf16 %v325, %v325
  %s327 = scalar_lea.vmem %s3, 128
  %v328 = vld [vmem:[%s327] sm:$0xf]
  %v329 = vld [vmem:[%s327 + $0x4] sm:$0xf]
  %v330 = vld [vmem:[%s327 + $0x8] sm:$0xf]
  %v331 = vld [vmem:[%s327 + $0xc] sm:$0xf]
  %v332 = vld [vmem:[%s327 + $0x10] sm:$0xf]
  %v333 = vld [vmem:[%s327 + $0x14] sm:$0xf]
  %v334 = vld [vmem:[%s327 + $0x18] sm:$0xf]
  %v335 = vld [vmem:[%s327 + $0x1c] sm:$0xf]
  %v336 = vld [vmem:[%s327 + $0x20] sm:$0xf]
  %v337 = vld [vmem:[%s327 + $0x24] sm:$0xf]
  %v338 = vld [vmem:[%s327 + $0x28] sm:$0xf]
  %v339 = vld [vmem:[%s327 + $0x2c] sm:$0xf]
  %v340 = vld [vmem:[%s327 + $0x30] sm:$0xf]
  %v341 = vld [vmem:[%s327 + $0x34] sm:$0xf]
  %v342 = vld [vmem:[%s327 + $0x38] sm:$0xf]
  %v343 = vld [vmem:[%s327 + $0x3c] sm:$0xf]
  %s344 = scalar_lea.vmem %s4, 2
  %v345 = vld [vmem:[%s344] sm:$0x1]
  %v347 = vlaneseq
  %v348 = vshrl.u32 %v347, 7
  %v349 = vsub.s32 0, %v348
  %v350 = vrot.slane %v345, %v349
  %v368 = vunpack.c.l.b16 %v328
  %v369 = vunpack.c.l.b16 %v329
  %v370 = vunpack.c.l.b16 %v330
  %v371 = vunpack.c.l.b16 %v331
  %v372 = vunpack.c.l.b16 %v332
  %v373 = vunpack.c.l.b16 %v333
  %v374 = vunpack.c.l.b16 %v334
  %v375 = vunpack.c.l.b16 %v335
  %v376 = vunpack.c.l.b16 %v336
  %v377 = vunpack.c.l.b16 %v337
  %v378 = vunpack.c.l.b16 %v338
  %v379 = vunpack.c.l.b16 %v339
  %v380 = vunpack.c.l.b16 %v340
  %v381 = vunpack.c.l.b16 %v341
  %v382 = vunpack.c.l.b16 %v342
  %v383 = vunpack.c.l.b16 %v343
  %v384 = vpack.c.b16 %v369, %v368
  %v385 = vpack.c.b16 %v371, %v370
  %v386 = vpack.c.b16 %v373, %v372
  %v387 = vpack.c.b16 %v375, %v374
  %v388 = vpack.c.b16 %v377, %v376
  %v389 = vpack.c.b16 %v379, %v378
  %v390 = vpack.c.b16 %v381, %v380
  %v391 = vpack.c.b16 %v383, %v382
  %400 = vmatprep.subr.bf16.mxu0 0
  %401 = vmatpush1.bf16.msra.mxu0 %v391
  %402 = vmatprep.subr.bf16.mxu0 0
  %403 = vmatpush1.bf16.msra.mxu0 %v390
  %404 = vmatprep.subr.bf16.mxu0 0
  %405 = vmatpush1.bf16.msra.mxu0 %v389
  %406 = vmatprep.subr.bf16.mxu0 0
  %407 = vmatpush1.bf16.msra.mxu0 %v388
  %408 = vmatprep.subr.bf16.mxu0 0
  %409 = vmatpush1.bf16.msra.mxu0 %v387
  %410 = vmatprep.subr.bf16.mxu0 0
  %411 = vmatpush1.bf16.msra.mxu0 %v386
  %412 = vmatprep.subr.bf16.mxu0 0
  %413 = vmatpush1.bf16.msra.mxu0 %v385
  %414 = vmatprep.subr.bf16.mxu0 0
  %415 = vmatpush1.bf16.msra.mxu0 %v384
  %416 = vmatprep.subr.bf16.mxu0 0
  %417 = vmatpush2.bf16.msra.mxu0 0
  %418 = vmatprep.subr.bf16.mxu0 0
  %419 = vmatpush2.bf16.msra.mxu0 0
  %420 = vmatprep.subr.bf16.mxu0 0
  %421 = vmatpush2.bf16.msra.mxu0 0
  %422 = vmatprep.subr.bf16.mxu0 0
  %423 = vmatpush2.bf16.msra.mxu0 0
  %424 = vmatprep.subr.bf16.mxu0 0
  %425 = vmatpush2.bf16.msra.mxu0 0
  %426 = vmatprep.subr.bf16.mxu0 0
  %427 = vmatpush2.bf16.msra.mxu0 0
  %428 = vmatprep.subr.bf16.mxu0 0
  %429 = vmatpush2.bf16.msra.mxu0 0
  %430 = vmatprep.subr.bf16.mxu0 0
  %431 = vmatpush2.bf16.msra.mxu0 0
  %432 = vmatprep.mubr.bf16.mxu0 0
  %433 = vmatmul.mubr.bf16.gmra.mxu0 %v326
  %v434 = vpop.f32.mrf.mxu0
  %v435 = vadd.f32 %v350, %v434
  %v436 = vpop.f32.mrf.mxu0
  %v437 = vpop.f32.mrf.mxu0
  %v438 = vpop.f32.mrf.mxu0
  %439 = vdwg.mxu0
  %440 = vst [vmem:[%s5] sm:$0xff] %v435
  // Predicated region
  $region22: #{forward.1} parent=0 // pred_check
    _
  $region23: #{forward.1} parent=0 // pred_check_branch
    %442 = sbr.rel (0) target = $region25
  $region24: #{forward.1} parent=0 // pred_region
    _
  $region25: #{forward.1} parent=0 // pred_fallthru
    _
  // Predicated region
  $region26: #{forward.1} parent=0 // pred_check
    _
  $region27: #{forward.1} parent=0 // pred_check_branch
    %444 = sbr.rel (0) target = $region29
  $region28: #{forward.1} parent=0 // pred_region
    _
  $region29: #{forward.1} parent=0 // pred_fallthru
    _

</llo_original>
